<compile_context>
chip_gen: v7x
topology: tpu7x:2x2x1
jax: 0.10.0
libtpu: 0.0.40
codegen_flags: <defaults>
</compile_context>

<pallas_src>
import jax
import jax.numpy as jnp
from jax.experimental import pallas as pl
from jax.experimental.pallas import tpu as pltpu

BN_EPS = 1e-5


def _round_up(x, m):
    return ((x + m - 1) // m) * m


def init_params(key, input_dim, out_dim, hidden_dim=64):
    """Deterministic init mirroring nn.Linear's U(-1/sqrt(fan_in), 1/sqrt(fan_in)).
    Weights are stored transposed: [in, out]."""
    def linear(k, fan_in, fan_out):
        kw, kb = jax.random.split(k)
        bound = 1.0 / jnp.sqrt(fan_in)
        w = jax.random.uniform(kw, (fan_in, fan_out), jnp.float32, -bound, bound)
        b = jax.random.uniform(kb, (1, fan_out), jnp.float32, -bound, bound)
        return w, b

    k1, k2, k3 = jax.random.split(key, 3)
    w1, b1 = linear(k1, input_dim, hidden_dim)
    w2, b2 = linear(k2, hidden_dim, hidden_dim)
    w3, b3 = linear(k3, hidden_dim, out_dim)
    return {"w1": w1, "b1": b1, "w2": w2, "b2": b2, "w3": w3, "b3": b3}


def pack_params(params, input_dim, hidden_dim, out_dim):
    """Pack w1,b1,w2,b2,w3,b3 into a single lane-dense [rows, LW] bf16 slab.

    All sections start on 16-row boundaries (bf16 packs 2 rows per sublane, so
    16 rows = one packed tile) and LW = 128 (one MXU tile wide).  fc1's weight
    section keeps only round_up(input_dim, 16) rows — no K=128 zero padding.
    Unset rows/cols are zero, which keeps the padded matmul chain exact.
    """
    K1 = _round_up(input_dim, 16)
    LW = max(_round_up(hidden_dim, 128), _round_up(out_dim, 128))   # 128 here; don't pad to 256

    o_w1 = 0
    o_b1 = K1
    o_w2 = K1 + 16
    o_b2 = o_w2 + LW
    o_w3 = o_b2 + 16
    o_b3 = o_w3 + LW
    rows = o_b3 + 16                                                # 320 for these shapes

    bf = jnp.bfloat16
    slab = jnp.zeros((rows, LW), bf)
    slab = slab.at[o_w1:o_w1 + input_dim, :hidden_dim].set(params["w1"].astype(bf))
    slab = slab.at[o_b1, :hidden_dim].set(params["b1"].reshape(-1).astype(bf))
    slab = slab.at[o_w2:o_w2 + hidden_dim, :hidden_dim].set(params["w2"].astype(bf))
    slab = slab.at[o_b2, :hidden_dim].set(params["b2"].reshape(-1).astype(bf))
    slab = slab.at[o_w3:o_w3 + hidden_dim, :out_dim].set(params["w3"].astype(bf))
    slab = slab.at[o_b3, :out_dim].set(params["b3"].reshape(-1).astype(bf))

    meta = dict(K1=K1, LW=LW, input_dim=input_dim, hidden_dim=hidden_dim,
                out_dim=out_dim, offsets=(o_w1, o_b1, o_w2, o_b2, o_w3, o_b3))
    return slab, meta


def mlp_forward(x, slab, meta):
    """x: [B, input_dim] f32; slab/meta from pack_params.

    Returns the lane-dense [B, LW] f32 output; columns [out_dim:LW] are exactly
    zero.  The out_dim slice is left to the consumer (keeps the kernel's store
    unmasked and avoids an extra XLA op on the hot path).
    """
    B, d_in = x.shape
    assert d_in == meta["input_dim"]
    K1, LW = meta["K1"], meta["LW"]
    o_w1, o_b1, o_w2, o_b2, o_w3, o_b3 = meta["offsets"]
    inv_b = 1.0 / float(B)
    if x.dtype != jnp.float32:
        x = x.astype(jnp.float32)

    def kernel(x_ref, p_ref, o_ref):
        xv = x_ref[...]                                            # [B, d_in] f32

        # ---- BatchNorm1d (training-mode batch stats), two-pass, f32 VPU ----
        mean = jnp.sum(xv, axis=0, keepdims=True) * inv_b          # [1, d_in]
        xc = xv - mean
        var = jnp.sum(xc * xc, axis=0, keepdims=True) * inv_b      # biased variance
        xn = xc * jax.lax.rsqrt(var + BN_EPS)                      # [B, d_in]
        if K1 != d_in:                                             # static: pad K to slab rows
            xn = jnp.pad(xn, ((0, 0), (0, K1 - d_in)))
        xn_bf = xn.astype(jnp.bfloat16)

        # ---- fc1 + relu (weights loaded right before use: short live ranges) ----
        w1 = p_ref[o_w1:o_w1 + K1, :]                              # [K1, LW] bf16
        b1 = p_ref[o_b1:o_b1 + 1, :].astype(jnp.float32)           # [1,  LW] f32
        h1 = jnp.maximum(
            jnp.dot(xn_bf, w1, preferred_element_type=jnp.float32) + b1, 0.0)

        # ---- fc2 + relu ----
        w2 = p_ref[o_w2:o_w2 + LW, :]                              # [LW, LW] bf16
        b2 = p_ref[o_b2:o_b2 + 1, :].astype(jnp.float32)
        h2 = jnp.maximum(
            jnp.dot(h1.astype(jnp.bfloat16), w2,
                    preferred_element_type=jnp.float32) + b2, 0.0)

        # ---- fc3 (out_fn = identity) ----
        w3 = p_ref[o_w3:o_w3 + LW, :]                              # [LW, LW] bf16
        b3 = p_ref[o_b3:o_b3 + 1, :].astype(jnp.float32)
        out = jnp.dot(h2.astype(jnp.bfloat16), w3,
                      preferred_element_type=jnp.float32) + b3     # [B, LW] f32

        o_ref[...] = out.astype(o_ref.dtype)                       # lane-dense, unmasked store

    vmem = pl.BlockSpec(memory_space=pltpu.MemorySpace.VMEM)
    return pl.pallas_call(
        kernel,
        out_shape=jax.ShapeDtypeStruct((B, LW), jnp.float32),
        in_specs=[vmem, vmem],
        out_specs=vmem,
    )(x, slab)


def mlp_reference(x, params):
    """Pure-JAX f32 reference (PyTorch-faithful two-pass training-mode BN)."""
    mean = jnp.mean(x, axis=0, keepdims=True)
    var = jnp.mean((x - mean) ** 2, axis=0, keepdims=True)
    xn = (x - mean) / jnp.sqrt(var + BN_EPS)
    h1 = jnp.maximum(xn @ params["w1"] + params["b1"], 0.0)
    h2 = jnp.maximum(h1 @ params["w2"] + params["b2"], 0.0)
    return h2 @ params["w3"] + params["b3"]


def mlp_reference_bf16(x, params):
    """Pure-JAX mirror of the kernel's exact numerics: f32 BN on the VPU path,
    bf16 weights/activations into the matmuls, f32 accumulation and bias adds.
    Used to validate the kernel mechanics at a tight tolerance independently of
    the (expected) bf16-vs-f32 rounding difference."""
    bf = jnp.bfloat16
    mean = jnp.mean(x, axis=0, keepdims=True)
    xc = x - mean
    var = jnp.mean(xc * xc, axis=0, keepdims=True)
    xn = xc * jax.lax.rsqrt(var + BN_EPS)

    def lin(a, w, b):
        y = jnp.dot(a.astype(bf), w.astype(bf), preferred_element_type=jnp.float32)
        return y + b.astype(bf).astype(jnp.float32)

    h1 = jnp.maximum(lin(xn, params["w1"], params["b1"]), 0.0)
    h2 = jnp.maximum(lin(h1, params["w2"], params["b2"]), 0.0)
    return lin(h2, params["w3"], params["b3"])


if __name__ == "__main__":
    key = jax.random.PRNGKey(0)
    k_x, k_p = jax.random.split(key)

    batch, input_dim, hidden_dim, out_dim = 8, 16, 64, 5
    x = jax.random.normal(k_x, (batch, input_dim), jnp.float32)
    params = init_params(k_p, input_dim, out_dim, hidden_dim)

    slab, meta = pack_params(params, input_dim, hidden_dim, out_dim)

    out_pad = jax.block_until_ready(mlp_forward(x, slab, meta))
    assert out_pad.shape == (batch, meta["LW"])
    out = out_pad[:, :out_dim]                 # slice fused into the consumer

    # (1) Mechanics check vs the exact bf16-numerics mirror (tight tolerance).
    ref_bf16 = mlp_reference_bf16(x, params)
    assert jnp.allclose(out, ref_bf16, atol=5e-3, rtol=5e-3), "mismatch vs bf16 mirror"

    # (2) Semantic check vs the f32 PyTorch-faithful reference; tolerance set by
    #     bf16 matmul operand rounding (~2^-9 relative per operand, 3 layers).
    ref_f32 = mlp_reference(x, params)
    assert jnp.allclose(out, ref_f32, atol=4e-2, rtol=4e-2), "mismatch vs f32 reference"

    # Padded output lanes must be exactly zero (zero weight cols / bias lanes).
    assert bool(jnp.all(out_pad[:, out_dim:] == 0.0))

    print("KERNEL_OK")
</pallas_src>

<mosaic_0001>
module attributes {stable_mosaic.version = 11 : i64} {
  func.func @kernel(%arg0: memref<8x16xf32, #tpu.memory_space<vmem>>, %arg1: memref<320x128xbf16, #tpu.memory_space<vmem>>, %arg2: memref<8x128xf32, #tpu.memory_space<vmem>>) attributes {dimension_semantics = [], scalar_prefetch = 0 : i64, scratch_operands = 0 : i64, tpu.core_type = #tpu.core_type<tc>} {
    %c0 = arith.constant 0 : index
    %c0_0 = arith.constant 0 : index
    %0 = vector.load %arg0[%c0, %c0_0] : memref<8x16xf32, #tpu.memory_space<vmem>>, vector<8x16xf32>
    %cst = arith.constant dense<0.000000e+00> : vector<16xf32>
    %1 = vector.multi_reduction <add>, %0, %cst [0] : vector<8x16xf32> to vector<16xf32>
    %2 = vector.shape_cast %1 : vector<16xf32> to vector<1x16xf32>
    %cst_1 = arith.constant 1.250000e-01 : f32
    %3 = vector.broadcast %cst_1 : f32 to vector<1x16xf32>
    %4 = arith.mulf %2, %3 : vector<1x16xf32>
    %5 = vector.broadcast %4 : vector<1x16xf32> to vector<8x16xf32>
    %6 = arith.subf %0, %5 : vector<8x16xf32>
    %7 = arith.mulf %6, %6 : vector<8x16xf32>
    %cst_2 = arith.constant dense<0.000000e+00> : vector<16xf32>
    %8 = vector.multi_reduction <add>, %7, %cst_2 [0] : vector<8x16xf32> to vector<16xf32>
    %9 = vector.shape_cast %8 : vector<16xf32> to vector<1x16xf32>
    %cst_3 = arith.constant 1.250000e-01 : f32
    %10 = vector.broadcast %cst_3 : f32 to vector<1x16xf32>
    %11 = arith.mulf %9, %10 : vector<1x16xf32>
    %cst_4 = arith.constant 9.99999974E-6 : f32
    %12 = vector.broadcast %cst_4 : f32 to vector<1x16xf32>
    %13 = arith.addf %11, %12 : vector<1x16xf32>
    %14 = math.rsqrt %13 : vector<1x16xf32>
    %15 = vector.broadcast %14 : vector<1x16xf32> to vector<8x16xf32>
    %16 = arith.mulf %6, %15 : vector<8x16xf32>
    %17 = arith.truncf %16 : vector<8x16xf32> to vector<8x16xbf16>
    %c0_5 = arith.constant 0 : index
    %c0_6 = arith.constant 0 : index
    %18 = vector.load %arg1[%c0_5, %c0_6] : memref<320x128xbf16, #tpu.memory_space<vmem>>, vector<16x128xbf16>
    %c16 = arith.constant 16 : index
    %c0_7 = arith.constant 0 : index
    %19 = vector.load %arg1[%c16, %c0_7] : memref<320x128xbf16, #tpu.memory_space<vmem>>, vector<1x128xbf16>
    %20 = arith.extf %19 : vector<1x128xbf16> to vector<1x128xf32>
    %cst_8 = arith.constant dense<0.000000e+00> : vector<8x128xf32>
    %21 = tpu.matmul %17, %18, %cst_8 {dimension_numbers = #tpu.dot_dimension_numbers<[1], [0], [0], [1], [0, 0, 1, 1], [], []>} : vector<8x16xbf16>, vector<16x128xbf16>, vector<8x128xf32> -> vector<8x128xf32>
    %22 = vector.broadcast %20 : vector<1x128xf32> to vector<8x128xf32>
    %23 = arith.addf %21, %22 : vector<8x128xf32>
    %cst_9 = arith.constant 0.000000e+00 : f32
    %24 = vector.broadcast %cst_9 : f32 to vector<8x128xf32>
    %25 = arith.maximumf %23, %24 : vector<8x128xf32>
    %c32 = arith.constant 32 : index
    %c0_10 = arith.constant 0 : index
    %26 = vector.load %arg1[%c32, %c0_10] : memref<320x128xbf16, #tpu.memory_space<vmem>>, vector<128x128xbf16>
    %c160 = arith.constant 160 : index
    %c0_11 = arith.constant 0 : index
    %27 = vector.load %arg1[%c160, %c0_11] : memref<320x128xbf16, #tpu.memory_space<vmem>>, vector<1x128xbf16>
    %28 = arith.extf %27 : vector<1x128xbf16> to vector<1x128xf32>
    %29 = arith.truncf %25 : vector<8x128xf32> to vector<8x128xbf16>
    %cst_12 = arith.constant dense<0.000000e+00> : vector<8x128xf32>
    %30 = tpu.matmul %29, %26, %cst_12 {dimension_numbers = #tpu.dot_dimension_numbers<[1], [0], [0], [1], [0, 0, 1, 1], [], []>} : vector<8x128xbf16>, vector<128x128xbf16>, vector<8x128xf32> -> vector<8x128xf32>
    %31 = vector.broadcast %28 : vector<1x128xf32> to vector<8x128xf32>
    %32 = arith.addf %30, %31 : vector<8x128xf32>
    %cst_13 = arith.constant 0.000000e+00 : f32
    %33 = vector.broadcast %cst_13 : f32 to vector<8x128xf32>
    %34 = arith.maximumf %32, %33 : vector<8x128xf32>
    %c176 = arith.constant 176 : index
    %c0_14 = arith.constant 0 : index
    %35 = vector.load %arg1[%c176, %c0_14] : memref<320x128xbf16, #tpu.memory_space<vmem>>, vector<128x128xbf16>
    %c304 = arith.constant 304 : index
    %c0_15 = arith.constant 0 : index
    %36 = vector.load %arg1[%c304, %c0_15] : memref<320x128xbf16, #tpu.memory_space<vmem>>, vector<1x128xbf16>
    %37 = arith.extf %36 : vector<1x128xbf16> to vector<1x128xf32>
    %38 = arith.truncf %34 : vector<8x128xf32> to vector<8x128xbf16>
    %cst_16 = arith.constant dense<0.000000e+00> : vector<8x128xf32>
    %39 = tpu.matmul %38, %35, %cst_16 {dimension_numbers = #tpu.dot_dimension_numbers<[1], [0], [0], [1], [0, 0, 1, 1], [], []>} : vector<8x128xbf16>, vector<128x128xbf16>, vector<8x128xf32> -> vector<8x128xf32>
    %40 = vector.broadcast %37 : vector<1x128xf32> to vector<8x128xf32>
    %41 = arith.addf %39, %40 : vector<8x128xf32>
    %c0_17 = arith.constant 0 : index
    %c0_18 = arith.constant 0 : index
    %42 = vector.load %arg2[%c0_17, %c0_18] : memref<8x128xf32, #tpu.memory_space<vmem>>, vector<8x128xf32>
    tpu.vector_store %arg2[%c0_17, %c0_18], %41 {strides = array<i32>} : memref<8x128xf32, #tpu.memory_space<vmem>>, vector<8x128xf32>,
    return
  }
}

</mosaic_0001>

<llo_original>
// kernel: tpu_custom_call.1
$region0: #{tpu_custom_call.1}
  #allocation0 [shape = 'u32[]', space=smem, size = 0x4, offset = 0x4, fixed_abs, tag = 'smem constant byte address 0x4 - core index']
  #allocation1 [shape = 'u32[144,128]{1,0:T(1,128)}', space=vmem, size = 0x12000, scoped, tag = 'internal scratch']
  %s0 = inlined_call_operand.hbm [shape: f32[8,16], index: 0, kind: input, shape index: {}]
  %s1 = inlined_call_operand.hbm [shape: bf16[320,128], index: 1, kind: input, shape index: {}]
  %s2 = inlined_call_operand.hbm [shape: f32[8,128], index: 2, kind: output, shape index: {}]
  %s3 = sld [smem:[#allocation0]]
  $region26: #{tpu_custom_call.1} parent=0
    _
  %s5 = ssub.s32 1, %s3
  %s6 = scalar_select 0, %s5, %s3
  $region1: #{tpu_custom_call.1} parent=0
    #allocation2 [shape = 'u8[4096]{0}', space=vmem, size = 0x1000, scoped, tag = 'input window, operand 0, single buffered']
    #allocation3 [shape = 's32[1]{0}', space=sflag, size = 0x4, scoped, tag = 'scoped memory for tpu_custom_call.1']
    #allocation4 [shape = 's32[1]{0}', space=sflag, size = 0x4, scoped, tag = 'scoped memory for tpu_custom_call.1']
    #allocation5 [shape = 'u8[81920]{0}', space=vmem, size = 0x14000, scoped, tag = 'input window, operand 1, single buffered']
    #allocation6 [shape = 's32[1]{0}', space=sflag, size = 0x4, scoped, tag = 'scoped memory for tpu_custom_call.1']
    #allocation7 [shape = 'u8[4096]{0}', space=vmem, size = 0x1000, scoped, tag = 'output window, operand 0, single buffered']
    %7 = vsyncpa [#allocation3], 0
    %8 = vsyncpa [#allocation6], 0
    %9 = vsyncpa [#allocation4], 0
    // Predicated region
    $region2: #{tpu_custom_call.1} parent=1 // pred_check
      _
    $region3: #{tpu_custom_call.1} parent=1 // pred_check_branch
      %11 = sbr.rel (0) target = $region5
    $region4: #{tpu_custom_call.1} parent=1 // pred_region
      %s13 = ssub.s32 128, 128
      %14 = vsyncadd [#allocation3], %s13
      %s16 = sshll.u32 [#allocation2], 4
      %s17 = int_to_ptr.vmem [resolvable:$true] %s16
      %19 = dma.hbm_to_vmem [thread:$0]  %s0, 128, %s17, [#allocation3]
    $region5: #{tpu_custom_call.1} parent=1 // pred_fallthru
      _
    // Predicated region
    $region6: #{tpu_custom_call.1} parent=1 // pred_check
      _
    $region7: #{tpu_custom_call.1} parent=1 // pred_check_branch
      %21 = sbr.rel (0) target = $region9
    $region8: #{tpu_custom_call.1} parent=1 // pred_region
      %s23 = ssub.s32 2560, 2560
      %24 = vsyncadd [#allocation6], %s23
      %s25 = sshll.u32 [#allocation5], 4
      %s26 = int_to_ptr.vmem [resolvable:$true] %s25
      %31 = dma.hbm_to_vmem [thread:$0]  %s1, 2560, %s26, [#allocation6], 64, 64, 4
    $region9: #{tpu_custom_call.1} parent=1 // pred_fallthru
      _
    // Predicated region
    $region10: #{tpu_custom_call.1} parent=1 // pred_check
      _
    $region11: #{tpu_custom_call.1} parent=1 // pred_check_branch
      %33 = sbr.rel (0) target = $region13
    $region12: #{tpu_custom_call.1} parent=1 // pred_region
      %34 = dma.done [#allocation3], 128
    $region13: #{tpu_custom_call.1} parent=1 // pred_fallthru
      _
    // Predicated region
    $region14: #{tpu_custom_call.1} parent=1 // pred_check
      _
    $region15: #{tpu_custom_call.1} parent=1 // pred_check_branch
      %36 = sbr.rel (0) target = $region17
    $region16: #{tpu_custom_call.1} parent=1 // pred_region
      %37 = dma.done [#allocation6], 2560
    $region17: #{tpu_custom_call.1} parent=1 // pred_fallthru
      _
    %v39 = vld [vmem:[#allocation2] sm:$0xff]
    %vm40 = vcmask 130048
    %v41 = vsel %vm40, %v39, 0.0
    %v42 = vrot.slane %v41, 4
    %v43 = vadd.f32 %v41, %v42
    %v44 = vrot.slane %v43, 2
    %v45 = vadd.f32 %v43, %v44
    %v46 = vrot.slane %v45, 1
    %v47 = vadd.f32 %v45, %v46
    %v48 = vmul.f32 %v47, 0.125
    %v49 = vsub.f32 %v39, %v48
    %v50 = vmul.f32 %v49, %v49
    %v51 = vsel %vm40, %v50, 0.0
    %v52 = vrot.slane %v51, 4
    %v53 = vadd.f32 %v51, %v52
    %v54 = vrot.slane %v53, 2
    %v55 = vadd.f32 %v53, %v54
    %v56 = vrot.slane %v55, 1
    %v57 = vadd.f32 %v55, %v56
    %v58 = vmul.f32 %v57, 0.125
    %v59 = vadd.f32 %v58, 1e-05
    %v60 = vrsqrt.pop %v59
    %v61 = vmul.f32 %v49, %v60
    %v62 = vpack.c.bf16 %v61, %v61
    %v63 = vld [vmem:[#allocation5] sm:$0xf]
    %v64 = vld [vmem:[#allocation5 + $0x4] sm:$0xf]
    %v65 = vld [vmem:[#allocation5 + $0x8] sm:$0x1]
    %v66 = vunpack.c.l.bf16 %v65
    %v67 = vlaneseq
    %v68 = vshrl.u32 %v67, 7
    %v69 = vsub.s32 0, %v68
    %v70 = vrot.slane %v66, %v69
    %v73 = vunpack.c.l.b16 %v63
    %v74 = vunpack.c.l.b16 %v64
    %v75 = vpack.c.b16 %v74, %v73
    %v78 = vsel %vm40, %v62, 0
    %80 = vmatprep.subr.bf16.mxu0 0
    %81 = vmatpush1.bf16.msra.mxu0 %v75
    %82 = vmatprep.subr.bf16.mxu0 0
    %83 = vmatpush1.bf16.msra.mxu0 0
    %84 = vmatprep.subr.bf16.mxu0 0
    %85 = vmatpush1.bf16.msra.mxu0 0
    %86 = vmatprep.subr.bf16.mxu0 0
    %87 = vmatpush1.bf16.msra.mxu0 0
    %88 = vmatprep.subr.bf16.mxu0 0
    %89 = vmatpush1.bf16.msra.mxu0 0
    %90 = vmatprep.subr.bf16.mxu0 0
    %91 = vmatpush1.bf16.msra.mxu0 0
    %92 = vmatprep.subr.bf16.mxu0 0
    %93 = vmatpush1.bf16.msra.mxu0 0
    %94 = vmatprep.subr.bf16.mxu0 0
    %95 = vmatpush1.bf16.msra.mxu0 0
    %96 = vmatprep.subr.bf16.mxu0 0
    %97 = vmatpush1.bf16.msra.mxu0 0
    %98 = vmatprep.subr.bf16.mxu0 0
    %99 = vmatpush1.bf16.msra.mxu0 0
    %100 = vmatprep.subr.bf16.mxu0 0
    %101 = vmatpush1.bf16.msra.mxu0 0
    %102 = vmatprep.subr.bf16.mxu0 0
    %103 = vmatpush1.bf16.msra.mxu0 0
    %104 = vmatprep.subr.bf16.mxu0 0
    %105 = vmatpush1.bf16.msra.mxu0 0
    %106 = vmatprep.subr.bf16.mxu0 0
    %107 = vmatpush1.bf16.msra.mxu0 0
    %108 = vmatprep.subr.bf16.mxu0 0
    %109 = vmatpush1.bf16.msra.mxu0 0
    %110 = vmatprep.subr.bf16.mxu0 0
    %111 = vmatpush1.bf16.msra.mxu0 0
    %112 = vmatprep.mubr.bf16.mxu0 0
    %113 = vmatmul.mubr.bf16.gmra.mrb[0].mxu0 %v78
    %v114 = vpop.f32.mrb[0].mxu0
    %v115 = vadd.f32 %v70, %v114
    %v116 = vpop.f32.mrb[0].mxu0
    %v117 = vpop.f32.mrb[0].mxu0
    %v118 = vpop.f32.mrb[0].mxu0
    %119 = vdwg.mxu0
    %v120 = vmax.f32 %v115, 0.0
    %v121 = vld [vmem:[#allocation5 + $0x10] sm:$0xf]
    %v122 = vld [vmem:[#allocation5 + $0x14] sm:$0xf]
    %v123 = vld [vmem:[#allocation5 + $0x18] sm:$0xf]
    %v124 = vld [vmem:[#allocation5 + $0x1c] sm:$0xf]
    %v125 = vld [vmem:[#allocation5 + $0x20] sm:$0xf]
    %v126 = vld [vmem:[#allocation5 + $0x24] sm:$0xf]
    %v127 = vld [vmem:[#allocation5 + $0x28] sm:$0xf]
    %v128 = vld [vmem:[#allocation5 + $0x2c] sm:$0xf]
    %v129 = vld [vmem:[#allocation5 + $0x30] sm:$0xf]
    %v130 = vld [vmem:[#allocation5 + $0x34] sm:$0xf]
    %v131 = vld [vmem:[#allocation5 + $0x38] sm:$0xf]
    %v132 = vld [vmem:[#allocation5 + $0x3c] sm:$0xf]
    %v133 = vld [vmem:[#allocation5 + $0x40] sm:$0xf]
    %v134 = vld [vmem:[#allocation5 + $0x44] sm:$0xf]
    %v135 = vld [vmem:[#allocation5 + $0x48] sm:$0xf]
    %v136 = vld [vmem:[#allocation5 + $0x4c] sm:$0xf]
    %v137 = vld [vmem:[#allocation5 + $0x50] sm:$0x1]
    %v138 = vunpack.c.l.bf16 %v137
    %v139 = vpack.c.bf16 %v120, %v120
    %v140 = vlaneseq
    %v141 = vshrl.u32 %v140, 7
    %v142 = vsub.s32 0, %v141
    %v143 = vrot.slane %v138, %v142
    %v160 = vunpack.c.l.b16 %v121
    %v161 = vunpack.c.l.b16 %v122
    %v162 = vunpack.c.l.b16 %v123
    %v163 = vunpack.c.l.b16 %v124
    %v164 = vunpack.c.l.b16 %v125
    %v165 = vunpack.c.l.b16 %v126
    %v166 = vunpack.c.l.b16 %v127
    %v167 = vunpack.c.l.b16 %v128
    %v168 = vunpack.c.l.b16 %v129
    %v169 = vunpack.c.l.b16 %v130
    %v170 = vunpack.c.l.b16 %v131
    %v171 = vunpack.c.l.b16 %v132
    %v172 = vunpack.c.l.b16 %v133
    %v173 = vunpack.c.l.b16 %v134
    %v174 = vunpack.c.l.b16 %v135
    %v175 = vunpack.c.l.b16 %v136
    %v176 = vpack.c.b16 %v161, %v160
    %v177 = vpack.c.b16 %v163, %v162
    %v178 = vpack.c.b16 %v165, %v164
    %v179 = vpack.c.b16 %v167, %v166
    %v180 = vpack.c.b16 %v169, %v168
    %v181 = vpack.c.b16 %v171, %v170
    %v182 = vpack.c.b16 %v173, %v172
    %v183 = vpack.c.b16 %v175, %v174
    %192 = vmatprep.subr.bf16.mxu0 0
    %193 = vmatpush1.bf16.msra.mxu0 %v176
    %194 = vmatprep.subr.bf16.mxu0 0
    %195 = vmatpush1.bf16.msra.mxu0 %v177
    %196 = vmatprep.subr.bf16.mxu0 0
    %197 = vmatpush1.bf16.msra.mxu0 %v178
    %198 = vmatprep.subr.bf16.mxu0 0
    %199 = vmatpush1.bf16.msra.mxu0 %v179
    %200 = vmatprep.subr.bf16.mxu0 0
    %201 = vmatpush1.bf16.msra.mxu0 %v180
    %202 = vmatprep.subr.bf16.mxu0 0
    %203 = vmatpush1.bf16.msra.mxu0 %v181
    %204 = vmatprep.subr.bf16.mxu0 0
    %205 = vmatpush1.bf16.msra.mxu0 %v182
    %206 = vmatprep.subr.bf16.mxu0 0
    %207 = vmatpush1.bf16.msra.mxu0 %v183
    %208 = vmatprep.subr.bf16.mxu0 0
    %209 = vmatpush1.bf16.msra.mxu0 0
    %210 = vmatprep.subr.bf16.mxu0 0
    %211 = vmatpush1.bf16.msra.mxu0 0
    %212 = vmatprep.subr.bf16.mxu0 0
    %213 = vmatpush1.bf16.msra.mxu0 0
    %214 = vmatprep.subr.bf16.mxu0 0
    %215 = vmatpush1.bf16.msra.mxu0 0
    %216 = vmatprep.subr.bf16.mxu0 0
    %217 = vmatpush1.bf16.msra.mxu0 0
    %218 = vmatprep.subr.bf16.mxu0 0
    %219 = vmatpush1.bf16.msra.mxu0 0
    %220 = vmatprep.subr.bf16.mxu0 0
    %221 = vmatpush1.bf16.msra.mxu0 0
    %222 = vmatprep.subr.bf16.mxu0 0
    %223 = vmatpush1.bf16.msra.mxu0 0
    %224 = vmatprep.mubr.bf16.mxu0 0
    %225 = vmatmul.mubr.bf16.gmra.mrb[0].mxu0 %v139
    %v226 = vpop.f32.mrb[0].mxu0
    %v227 = vadd.f32 %v143, %v226
    %v228 = vpop.f32.mrb[0].mxu0
    %v229 = vpop.f32.mrb[0].mxu0
    %v230 = vpop.f32.mrb[0].mxu0
    %231 = vdwg.mxu0
    %v232 = vmax.f32 %v227, 0.0
    %v233 = vld [vmem:[#allocation5 + $0x58] sm:$0xf]
    %v234 = vld [vmem:[#allocation5 + $0x5c] sm:$0xf]
    %v235 = vld [vmem:[#allocation5 + $0x60] sm:$0xf]
    %v236 = vld [vmem:[#allocation5 + $0x64] sm:$0xf]
    %v237 = vld [vmem:[#allocation5 + $0x68] sm:$0xf]
    %v238 = vld [vmem:[#allocation5 + $0x6c] sm:$0xf]
    %v239 = vld [vmem:[#allocation5 + $0x70] sm:$0xf]
    %v240 = vld [vmem:[#allocation5 + $0x74] sm:$0xf]
    %v241 = vld [vmem:[#allocation5 + $0x78] sm:$0xf]
    %v242 = vld [vmem:[#allocation5 + $0x7c] sm:$0xf]
    %v243 = vld [vmem:[#allocation5 + $0x80] sm:$0xf]
    %v244 = vld [vmem:[#allocation5 + $0x84] sm:$0xf]
    %v245 = vld [vmem:[#allocation5 + $0x88] sm:$0xf]
    %v246 = vld [vmem:[#allocation5 + $0x8c] sm:$0xf]
    %v247 = vld [vmem:[#allocation5 + $0x90] sm:$0xf]
    %v248 = vld [vmem:[#allocation5 + $0x94] sm:$0xf]
    %v249 = vld [vmem:[#allocation5 + $0x98] sm:$0x1]
    %v250 = vunpack.c.l.bf16 %v249
    %v251 = vpack.c.bf16 %v232, %v232
    %v252 = vlaneseq
    %v253 = vshrl.u32 %v252, 7
    %v254 = vsub.s32 0, %v253
    %v255 = vrot.slane %v250, %v254
    %v272 = vunpack.c.l.b16 %v233
    %v273 = vunpack.c.l.b16 %v234
    %v274 = vunpack.c.l.b16 %v235
    %v275 = vunpack.c.l.b16 %v236
    %v276 = vunpack.c.l.b16 %v237
    %v277 = vunpack.c.l.b16 %v238
    %v278 = vunpack.c.l.b16 %v239
    %v279 = vunpack.c.l.b16 %v240
    %v280 = vunpack.c.l.b16 %v241
    %v281 = vunpack.c.l.b16 %v242
    %v282 = vunpack.c.l.b16 %v243
    %v283 = vunpack.c.l.b16 %v244
    %v284 = vunpack.c.l.b16 %v245
    %v285 = vunpack.c.l.b16 %v246
    %v286 = vunpack.c.l.b16 %v247
    %v287 = vunpack.c.l.b16 %v248
    %v288 = vpack.c.b16 %v273, %v272
    %v289 = vpack.c.b16 %v275, %v274
    %v290 = vpack.c.b16 %v277, %v276
    %v291 = vpack.c.b16 %v279, %v278
    %v292 = vpack.c.b16 %v281, %v280
    %v293 = vpack.c.b16 %v283, %v282
    %v294 = vpack.c.b16 %v285, %v284
    %v295 = vpack.c.b16 %v287, %v286
    %304 = vmatprep.subr.bf16.mxu0 0
    %305 = vmatpush1.bf16.msra.mxu0 %v288
    %306 = vmatprep.subr.bf16.mxu0 0
    %307 = vmatpush1.bf16.msra.mxu0 %v289
    %308 = vmatprep.subr.bf16.mxu0 0
    %309 = vmatpush1.bf16.msra.mxu0 %v290
    %310 = vmatprep.subr.bf16.mxu0 0
    %311 = vmatpush1.bf16.msra.mxu0 %v291
    %312 = vmatprep.subr.bf16.mxu0 0
    %313 = vmatpush1.bf16.msra.mxu0 %v292
    %314 = vmatprep.subr.bf16.mxu0 0
    %315 = vmatpush1.bf16.msra.mxu0 %v293
    %316 = vmatprep.subr.bf16.mxu0 0
    %317 = vmatpush1.bf16.msra.mxu0 %v294
    %318 = vmatprep.subr.bf16.mxu0 0
    %319 = vmatpush1.bf16.msra.mxu0 %v295
    %320 = vmatprep.subr.bf16.mxu0 0
    %321 = vmatpush1.bf16.msra.mxu0 0
    %322 = vmatprep.subr.bf16.mxu0 0
    %323 = vmatpush1.bf16.msra.mxu0 0
    %324 = vmatprep.subr.bf16.mxu0 0
    %325 = vmatpush1.bf16.msra.mxu0 0
    %326 = vmatprep.subr.bf16.mxu0 0
    %327 = vmatpush1.bf16.msra.mxu0 0
    %328 = vmatprep.subr.bf16.mxu0 0
    %329 = vmatpush1.bf16.msra.mxu0 0
    %330 = vmatprep.subr.bf16.mxu0 0
    %331 = vmatpush1.bf16.msra.mxu0 0
    %332 = vmatprep.subr.bf16.mxu0 0
    %333 = vmatpush1.bf16.msra.mxu0 0
    %334 = vmatprep.subr.bf16.mxu0 0
    %335 = vmatpush1.bf16.msra.mxu0 0
    %336 = vmatprep.mubr.bf16.mxu0 0
    %337 = vmatmul.mubr.bf16.gmra.mrb[0].mxu0 %v251
    %v338 = vpop.f32.mrb[0].mxu0
    %v339 = vadd.f32 %v255, %v338
    %v340 = vpop.f32.mrb[0].mxu0
    %v341 = vpop.f32.mrb[0].mxu0
    %v342 = vpop.f32.mrb[0].mxu0
    %343 = vdwg.mxu0
    %344 = vst [vmem:[#allocation7] sm:$0xff] %v339
    // Predicated region
    $region18: #{tpu_custom_call.1} parent=1 // pred_check
      _
    $region19: #{tpu_custom_call.1} parent=1 // pred_check_branch
      %346 = sbr.rel (0) target = $region21
    $region20: #{tpu_custom_call.1} parent=1 // pred_region
      %s348 = ssub.s32 128, 128
      %349 = vsyncadd [#allocation4], %s348
      %s351 = sshll.u32 [#allocation7], 4
      %s352 = int_to_ptr.vmem [resolvable:$true] %s351
      %354 = dma.vmem_to_hbm [thread:$0]  %s352, 128, %s2, [#allocation4]
    $region21: #{tpu_custom_call.1} parent=1 // pred_fallthru
      _
    // Predicated region
    $region22: #{tpu_custom_call.1} parent=1 // pred_check
      _
    $region23: #{tpu_custom_call.1} parent=1 // pred_check_branch
      %356 = sbr.rel (0) target = $region25
    $region24: #{tpu_custom_call.1} parent=1 // pred_region
      %357 = dma.done [#allocation4], 128
    $region25: #{tpu_custom_call.1} parent=1 // pred_fallthru
      _
    %358 = vsyncpa [#allocation3], 1
    %359 = vsyncpa [#allocation6], 1
    %360 = vsyncpa [#allocation4], 1

</llo_original>
